<compile_context>
chip_gen: v6e
topology: v6e:2x2x1
jax: 0.10.0
libtpu: 0.0.40
codegen_flags: <defaults>
</compile_context>

<pallas_src>
import jax
import jax.numpy as jnp
from jax.experimental import pallas as pl
from jax.experimental.pallas import tpu as pltpu


def critic_kernel(sa_ref, w1t_ref, b1_ref, w2t_ref, b2_ref, w3_ref, b3_ref, o_ref):
    # sa : [8, TB]  (rows 0:5 state^T, row 5 action, rows 6:7 zero)
    # w1t: [H, 8]   (W1^T with two zero K-columns matching the pad rows)
    # b1 : [H, 1]   w2t: [H, H]   b2: [H, 1]   w3: [1, H]
    # b3 : [1, 1]   (SMEM scalar)
    # o  : [1, TB]  (lane-dense output row)
    sa = sa_ref[...]

    # Layer 1 (concat fused via packed input / padded W1):  [H, TB]
    h1 = jnp.dot(w1t_ref[...], sa, preferred_element_type=jnp.float32) + b1_ref[...]
    h1 = jnp.maximum(h1, 0.0)

    # Layer 2:  [H, TB]
    h2 = jnp.dot(w2t_ref[...], h1, preferred_element_type=jnp.float32) + b2_ref[...]
    h2 = jnp.maximum(h2, 0.0)

    # Layer 3:  [1, TB]  (plain matmul; N = TB keeps MXU columns busy)
    out = jnp.dot(w3_ref[...], h2, preferred_element_type=jnp.float32)
    o_ref[...] = (out + b3_ref[0, 0]).astype(o_ref.dtype)


def _round_up(x, m):
    return ((x + m - 1) // m) * m


def _pick_row_tile(B, block_b):
    if B <= 512:
        return B                      # single full-extent tile (allowed even if B % 128 != 0)
    # >=512 rows per tile (HBM/DMA efficiency), <=block_b, and ~8 grid steps at
    # large B so each v7x TensorCore sees several pipelined steps.
    return max(512, min(block_b, _round_up(pl.cdiv(B, 8), 128)))


def critic_forward(state, action, params, *, block_b=4096):
    """state: [B, 5] f32, action: [B] f32 -> [B, 1] f32 (module semantics)."""
    w1t, b1, w2t, b2, w3, b3 = params
    B = state.shape[0]

    # Pack [state^T; action; 0; 0] into a feature-major [8, B] slab: a single
    # lane-contiguous DMA stream (layout plumbing only, no compute hoisted).
    sa = jnp.concatenate(
        [state.T, action.reshape(1, B), jnp.zeros((2, B), state.dtype)], axis=0)

    tb = _pick_row_tile(B, block_b)
    nb = pl.cdiv(B, tb)

    def resident(shape):              # weights/biases: same block every grid step
        return pl.BlockSpec(shape, lambda i: (0,) * len(shape))

    out_row = pl.pallas_call(
        critic_kernel,
        out_shape=jax.ShapeDtypeStruct((1, B), jnp.float32),
        grid=(nb,),
        in_specs=[
            pl.BlockSpec((8, tb), lambda i: (0, i)),            # streamed packed tile
            resident(w1t.shape),
            resident(b1.shape),
            resident(w2t.shape),
            resident(b2.shape),
            resident(w3.shape),
            pl.BlockSpec(memory_space=pltpu.MemorySpace.SMEM),  # b3 scalar
        ],
        out_specs=pl.BlockSpec((1, tb), lambda i: (0, i)),      # lane-dense output row
        compiler_params=pltpu.CompilerParams(
            dimension_semantics=("parallel",),
        ),
    )(sa, w1t, b1, w2t, b2, w3, b3)

    return out_row.reshape(B, 1)


def init_critic_params(key, hidden_dim):
    """PyTorch Linear default init: U(-1/sqrt(fan_in), +1/sqrt(fan_in)).

    Returned in the kernel's batch-on-lanes layout:
      w1t [H, 8] (= W1^T zero-padded from K=6 to K=8), b1 [H, 1],
      w2t [H, H] (= W2^T), b2 [H, 1], w3 [1, H], b3 [1, 1].
    """
    ks = jax.random.split(key, 6)

    def linear(kw, kb, fan_in, fan_out):
        bound = 1.0 / jnp.sqrt(jnp.float32(fan_in))
        w = jax.random.uniform(kw, (fan_in, fan_out), jnp.float32, -bound, bound)
        b = jax.random.uniform(kb, (fan_out,), jnp.float32, -bound, bound)
        return w, b

    w1, b1 = linear(ks[0], ks[1], 6, hidden_dim)
    w2, b2 = linear(ks[2], ks[3], hidden_dim, hidden_dim)
    w3, b3 = linear(ks[4], ks[5], hidden_dim, 1)

    w1t = jnp.concatenate([w1.T, jnp.zeros((hidden_dim, 2), jnp.float32)], axis=1)
    return (w1t, b1.reshape(hidden_dim, 1), w2.T, b2.reshape(hidden_dim, 1),
            w3.T, b3.reshape(1, 1))


def critic_reference(state, action, params):
    """Pure-JAX reference (algebraically identical to cat + Sequential)."""
    w1t, b1, w2t, b2, w3, b3 = params
    sa = jnp.concatenate([state, action[:, None]], axis=1)        # [B, 6]
    h1 = jnp.maximum(sa @ w1t[:, :6].T + b1.T, 0.0)
    h2 = jnp.maximum(h1 @ w2t.T + b2.T, 0.0)
    return h2 @ w3.T + b3


if __name__ == "__main__":
    key = jax.random.PRNGKey(0)
    k_data, k_params = jax.random.split(key)

    hidden_dim = 32
    params = init_critic_params(k_params, hidden_dim)

    # batch=8    : small smoke test, single full-extent tile
    # batch=1024 : two 512-row tiles (tiled / pipelined grid path)
    # batch=1000 : partial final tile (OOB-padded input, clipped writeback)
    for batch in (8, 1024, 1000):
        ks, ka = jax.random.split(jax.random.fold_in(k_data, batch))
        state = jax.random.normal(ks, (batch, 5), jnp.float32)
        action = jax.random.normal(ka, (batch,), jnp.float32)

        out = jax.block_until_ready(critic_forward(state, action, params))
        ref = critic_reference(state, action, params)
        assert out.shape == (batch, 1), out.shape
        assert jnp.allclose(out, ref, atol=1e-4, rtol=1e-4), f"mismatch at batch={batch}"

    print("KERNEL_OK")
</pallas_src>

<mosaic_0001>
module attributes {stable_mosaic.version = 11 : i64} {
  func.func @critic_kernel(%arg0: i32, %arg1: memref<8x8xf32, #tpu.memory_space<vmem>>, %arg2: memref<32x8xf32, #tpu.memory_space<vmem>>, %arg3: memref<32x1xf32, #tpu.memory_space<vmem>>, %arg4: memref<32x32xf32, #tpu.memory_space<vmem>>, %arg5: memref<32x1xf32, #tpu.memory_space<vmem>>, %arg6: memref<1x32xf32, #tpu.memory_space<vmem>>, %arg7: memref<1x1xf32, #tpu.memory_space<smem>>, %arg8: memref<1x8xf32, #tpu.memory_space<vmem>>) attributes {dimension_semantics = [#tpu.dimension_semantics<parallel>], iteration_bounds = array<i64: 1>, scalar_prefetch = 0 : i64, scratch_operands = 0 : i64, tpu.core_type = #tpu.core_type<tc>, window_params = [{transform_indices = @transform_0, window_bounds = array<i64: 8, 8>}, {pipeline_mode = #tpu.pipeline_mode<synchronous>, transform_indices = @transform_1, window_bounds = array<i64: 32, 8>}, {pipeline_mode = #tpu.pipeline_mode<synchronous>, transform_indices = @transform_2, window_bounds = array<i64: 32, 1>}, {pipeline_mode = #tpu.pipeline_mode<synchronous>, transform_indices = @transform_3, window_bounds = array<i64: 32, 32>}, {pipeline_mode = #tpu.pipeline_mode<synchronous>, transform_indices = @transform_4, window_bounds = array<i64: 32, 1>}, {pipeline_mode = #tpu.pipeline_mode<synchronous>, transform_indices = @transform_5, window_bounds = array<i64: 1, 32>}, {transform_indices = @transform_6, window_bounds = array<i64: 1, 1>}, {transform_indices = @transform_7, window_bounds = array<i64: 1, 8>}]} {
    %c0 = arith.constant 0 : index
    %c0_0 = arith.constant 0 : index
    %0 = vector.load %arg1[%c0, %c0_0] : memref<8x8xf32, #tpu.memory_space<vmem>>, vector<8x8xf32>
    %c0_1 = arith.constant 0 : index
    %c0_2 = arith.constant 0 : index
    %1 = vector.load %arg2[%c0_1, %c0_2] : memref<32x8xf32, #tpu.memory_space<vmem>>, vector<32x8xf32>
    %cst = arith.constant dense<0.000000e+00> : vector<32x8xf32>
    %2 = tpu.matmul %1, %0, %cst {dimension_numbers = #tpu.dot_dimension_numbers<[1], [0], [0], [1], [0, 0, 1, 1], [], []>} : vector<32x8xf32>, vector<8x8xf32>, vector<32x8xf32> -> vector<32x8xf32>
    %c0_3 = arith.constant 0 : index
    %c0_4 = arith.constant 0 : index
    %3 = vector.load %arg3[%c0_3, %c0_4] : memref<32x1xf32, #tpu.memory_space<vmem>>, vector<32x1xf32>
    %4 = vector.broadcast %3 : vector<32x1xf32> to vector<32x8xf32>
    %5 = arith.addf %2, %4 : vector<32x8xf32>
    %cst_5 = arith.constant 0.000000e+00 : f32
    %6 = vector.broadcast %cst_5 : f32 to vector<32x8xf32>
    %7 = arith.maximumf %5, %6 : vector<32x8xf32>
    %c0_6 = arith.constant 0 : index
    %c0_7 = arith.constant 0 : index
    %8 = vector.load %arg4[%c0_6, %c0_7] : memref<32x32xf32, #tpu.memory_space<vmem>>, vector<32x32xf32>
    %cst_8 = arith.constant dense<0.000000e+00> : vector<32x8xf32>
    %9 = tpu.matmul %8, %7, %cst_8 {dimension_numbers = #tpu.dot_dimension_numbers<[1], [0], [0], [1], [0, 0, 1, 1], [], []>} : vector<32x32xf32>, vector<32x8xf32>, vector<32x8xf32> -> vector<32x8xf32>
    %c0_9 = arith.constant 0 : index
    %c0_10 = arith.constant 0 : index
    %10 = vector.load %arg5[%c0_9, %c0_10] : memref<32x1xf32, #tpu.memory_space<vmem>>, vector<32x1xf32>
    %11 = vector.broadcast %10 : vector<32x1xf32> to vector<32x8xf32>
    %12 = arith.addf %9, %11 : vector<32x8xf32>
    %cst_11 = arith.constant 0.000000e+00 : f32
    %13 = vector.broadcast %cst_11 : f32 to vector<32x8xf32>
    %14 = arith.maximumf %12, %13 : vector<32x8xf32>
    %c0_12 = arith.constant 0 : index
    %c0_13 = arith.constant 0 : index
    %15 = vector.load %arg6[%c0_12, %c0_13] : memref<1x32xf32, #tpu.memory_space<vmem>>, vector<1x32xf32>
    %cst_14 = arith.constant dense<0.000000e+00> : vector<1x8xf32>
    %16 = tpu.matmul %15, %14, %cst_14 {dimension_numbers = #tpu.dot_dimension_numbers<[1], [0], [0], [1], [0, 0, 1, 1], [], []>} : vector<1x32xf32>, vector<32x8xf32>, vector<1x8xf32> -> vector<1x8xf32>
    %c0_15 = arith.constant 0 : index
    %c0_16 = arith.constant 0 : index
    %17 = memref.load %arg7[%c0_15, %c0_16] : memref<1x1xf32, #tpu.memory_space<smem>>
    %18 = vector.broadcast %17 : f32 to vector<1x8xf32>
    %19 = arith.addf %16, %18 : vector<1x8xf32>
    %c0_17 = arith.constant 0 : index
    %c0_18 = arith.constant 0 : index
    %20 = vector.load %arg8[%c0_17, %c0_18] : memref<1x8xf32, #tpu.memory_space<vmem>>, vector<1x8xf32>
    tpu.vector_store %arg8[%c0_17, %c0_18], %19 {strides = array<i32>} : memref<1x8xf32, #tpu.memory_space<vmem>>, vector<1x8xf32>,
    return
  }
  func.func @transform_0(%arg0: i32) -> (i32, i32) {
    %c0_i32 = arith.constant 0 : i32
    %c0_i32_0 = arith.constant 0 : i32
    return %c0_i32, %arg0 : i32, i32
  }
  func.func @transform_1(%arg0: i32) -> (i32, i32) {
    %c0_i32 = arith.constant 0 : i32
    %c0_i32_0 = arith.constant 0 : i32
    %c0_i32_1 = arith.constant 0 : i32
    return %c0_i32, %c0_i32_0 : i32, i32
  }
  func.func @transform_2(%arg0: i32) -> (i32, i32) {
    %c0_i32 = arith.constant 0 : i32
    %c0_i32_0 = arith.constant 0 : i32
    %c0_i32_1 = arith.constant 0 : i32
    return %c0_i32, %c0_i32_0 : i32, i32
  }
  func.func @transform_3(%arg0: i32) -> (i32, i32) {
    %c0_i32 = arith.constant 0 : i32
    %c0_i32_0 = arith.constant 0 : i32
    %c0_i32_1 = arith.constant 0 : i32
    return %c0_i32, %c0_i32_0 : i32, i32
  }
  func.func @transform_4(%arg0: i32) -> (i32, i32) {
    %c0_i32 = arith.constant 0 : i32
    %c0_i32_0 = arith.constant 0 : i32
    %c0_i32_1 = arith.constant 0 : i32
    return %c0_i32, %c0_i32_0 : i32, i32
  }
  func.func @transform_5(%arg0: i32) -> (i32, i32) {
    %c0_i32 = arith.constant 0 : i32
    %c0_i32_0 = arith.constant 0 : i32
    %c0_i32_1 = arith.constant 0 : i32
    return %c0_i32, %c0_i32_0 : i32, i32
  }
  func.func @transform_6(%arg0: i32) -> (i32, i32) {
    %c0_i32 = arith.constant 0 : i32
    %c0_i32_0 = arith.constant 0 : i32
    %c0_i32_1 = arith.constant 0 : i32
    return %c0_i32, %c0_i32_0 : i32, i32
  }
  func.func @transform_7(%arg0: i32) -> (i32, i32) {
    %c0_i32 = arith.constant 0 : i32
    %c0_i32_0 = arith.constant 0 : i32
    return %c0_i32, %arg0 : i32, i32
  }
}

</mosaic_0001>

<llo_original>
// kernel: tpu_custom_call.1
$region0: #{tpu_custom_call.1}
  #allocation0 [shape = 'u32[]', space=smem, size = 0x4, offset = 0x4, fixed_abs, tag = 'smem constant byte address 0x4 - core index']
  #allocation1 [shape = 'u32[144,128]{1,0:T(1,128)}', space=vmem, size = 0x12000, scoped, tag = 'internal scratch']
  #allocation2 [shape = 'f32[1,1]{1,0:T(1,128)S(6)}', space=smem, size = 0x200, scoped, tag = 'scoped memory for tpu_custom_call.1']
  %s0 = inlined_call_operand.vmem [shape: f32[8,8], index: 0, kind: input, shape index: {}]
  %s1 = inlined_call_operand.vmem [shape: f32[32,8], index: 1, kind: input, shape index: {}]
  %s2 = inlined_call_operand.vmem [shape: f32[32,1], index: 2, kind: input, shape index: {}]
  %s3 = inlined_call_operand.vmem [shape: f32[32,32], index: 3, kind: input, shape index: {}]
  %s4 = inlined_call_operand.vmem [shape: f32[32,1], index: 4, kind: input, shape index: {}]
  %s5 = inlined_call_operand.vmem [shape: f32[1,32], index: 5, kind: input, shape index: {}]
  %s6 = inlined_call_operand.<no memory space> [shape: f32[1,1], index: 6, kind: input, shape index: {}]
  %s7 = inlined_call_operand.hbm [shape: f32[1,8], index: 7, kind: output, shape index: {}]
  %s8 = sld [smem:[#allocation0]]
  $region38: #{tpu_custom_call.1} parent=0
    _
  %s10 = ssub.s32 1, %s8
  %s11 = scalar_select 0, %s10, %s8
  %12 = sst [smem:[#allocation2]] %s6
  $region1: #{tpu_custom_call.1} parent=0
    #allocation3 [shape = 'u8[512]{0}', space=vmem, size = 0x400, scoped, tag = 'output window, operand 0, single buffered']
    #allocation4 [shape = 's32[1]{0}', space=sflag, size = 0x4, scoped, tag = 'scoped memory for tpu_custom_call.1']
    %13 = vsyncpa [#allocation4], 0
    // Predicated region
    $region2: #{tpu_custom_call.1} parent=1 // pred_check
      _
    $region3: #{tpu_custom_call.1} parent=1 // pred_check_branch
      %15 = sbr.rel (0) target = $region5
    $region4: #{tpu_custom_call.1} parent=1 // pred_region
      _
    $region5: #{tpu_custom_call.1} parent=1 // pred_fallthru
      _
    // Predicated region
    $region6: #{tpu_custom_call.1} parent=1 // pred_check
      _
    $region7: #{tpu_custom_call.1} parent=1 // pred_check_branch
      %17 = sbr.rel (0) target = $region9
    $region8: #{tpu_custom_call.1} parent=1 // pred_region
      _
    $region9: #{tpu_custom_call.1} parent=1 // pred_fallthru
      _
    // Predicated region
    $region10: #{tpu_custom_call.1} parent=1 // pred_check
      _
    $region11: #{tpu_custom_call.1} parent=1 // pred_check_branch
      %19 = sbr.rel (0) target = $region13
    $region12: #{tpu_custom_call.1} parent=1 // pred_region
      _
    $region13: #{tpu_custom_call.1} parent=1 // pred_fallthru
      _
    // Predicated region
    $region14: #{tpu_custom_call.1} parent=1 // pred_check
      _
    $region15: #{tpu_custom_call.1} parent=1 // pred_check_branch
      %21 = sbr.rel (0) target = $region17
    $region16: #{tpu_custom_call.1} parent=1 // pred_region
      _
    $region17: #{tpu_custom_call.1} parent=1 // pred_fallthru
      _
    // Predicated region
    $region18: #{tpu_custom_call.1} parent=1 // pred_check
      _
    $region19: #{tpu_custom_call.1} parent=1 // pred_check_branch
      %23 = sbr.rel (0) target = $region21
    $region20: #{tpu_custom_call.1} parent=1 // pred_region
      _
    $region21: #{tpu_custom_call.1} parent=1 // pred_fallthru
      _
    // Predicated region
    $region22: #{tpu_custom_call.1} parent=1 // pred_check
      _
    $region23: #{tpu_custom_call.1} parent=1 // pred_check_branch
      %25 = sbr.rel (0) target = $region25
    $region24: #{tpu_custom_call.1} parent=1 // pred_region
      _
    $region25: #{tpu_custom_call.1} parent=1 // pred_fallthru
      _
    // Predicated region
    $region26: #{tpu_custom_call.1} parent=1 // pred_check
      _
    $region27: #{tpu_custom_call.1} parent=1 // pred_check_branch
      %27 = sbr.rel (0) target = $region29
    $region28: #{tpu_custom_call.1} parent=1 // pred_region
      _
    $region29: #{tpu_custom_call.1} parent=1 // pred_fallthru
      _
    %v28 = vld [vmem:[%s0] sm:$0xff]
    %v29 = vld [vmem:[%s1] sm:$0xff]
    %v30 = vld [vmem:[%s1 + $0x8] sm:$0xff]
    %v31 = vld [vmem:[%s1 + $0x10] sm:$0xff]
    %v32 = vld [vmem:[%s1 + $0x18] sm:$0xff]
    %v33 = vld [vmem:[%s2] sm:$0xff]
    %v34 = vld [vmem:[%s2 + $0x8] sm:$0xff]
    %v35 = vld [vmem:[%s2 + $0x10] sm:$0xff]
    %v36 = vld [vmem:[%s2 + $0x18] sm:$0xff]
    %38 = vset.pattern.permute.xlu0 0
    %39 = vperm.xlu0 %38, %v33
    %v40 = vpop.permute.xlu0 %39
    %43 = vset.pattern.permute.xlu0 0
    %44 = vperm.xlu0 %43, %v34
    %v45 = vpop.permute.xlu0 %44
    %48 = vset.pattern.permute.xlu0 0
    %49 = vperm.xlu0 %48, %v35
    %v50 = vpop.permute.xlu0 %49
    %53 = vset.pattern.permute.xlu0 0
    %54 = vperm.xlu0 %53, %v36
    %v55 = vpop.permute.xlu0 %54
    %vm57 = vcmask 64512
    %v59 = vsel %vm57, %v29, 0
    %v62 = vsel %vm57, %v30, 0
    %v65 = vsel %vm57, %v31, 0
    %v68 = vsel %vm57, %v32, 0
    %70 = vmatprep.subr.mxu0 0.0
    %71 = vmatpush1.msra.mxu0 0.0
    %72 = vmatprep.subr.mxu0 0.0
    %73 = vmatpush1.msra.mxu0 0.0
    %74 = vmatprep.subr.mxu0 0.0
    %75 = vmatpush1.msra.mxu0 0.0
    %76 = vmatprep.subr.mxu0 0.0
    %77 = vmatpush1.msra.mxu0 0.0
    %78 = vmatprep.subr.mxu0 0.0
    %79 = vmatpush1.msra.mxu0 0.0
    %80 = vmatprep.subr.mxu0 0.0
    %81 = vmatpush1.msra.mxu0 0.0
    %82 = vmatprep.subr.mxu0 0.0
    %83 = vmatpush1.msra.mxu0 0.0
    %84 = vmatprep.subr.mxu0 0.0
    %85 = vmatpush1.msra.mxu0 0.0
    %86 = vmatprep.subr.mxu0 0.0
    %87 = vmatpush1.msra.mxu0 0.0
    %88 = vmatprep.subr.mxu0 0.0
    %89 = vmatpush1.msra.mxu0 0.0
    %90 = vmatprep.subr.mxu0 0.0
    %91 = vmatpush1.msra.mxu0 0.0
    %92 = vmatprep.subr.mxu0 0.0
    %93 = vmatpush1.msra.mxu0 0.0
    %94 = vmatprep.subr.mxu0 0.0
    %95 = vmatpush1.msra.mxu0 0.0
    %96 = vmatprep.subr.mxu0 0.0
    %97 = vmatpush1.msra.mxu0 0.0
    %98 = vmatprep.subr.mxu0 0.0
    %99 = vmatpush1.msra.mxu0 0.0
    %100 = vmatprep.subr.mxu0 0.0
    %101 = vmatpush1.msra.mxu0 %v28
    %102 = vmatprep.subr.mxu0 0.0
    %103 = vmatpush2.msra.mxu0 0.0
    %104 = vmatprep.subr.mxu0 0.0
    %105 = vmatpush2.msra.mxu0 0.0
    %106 = vmatprep.subr.mxu0 0.0
    %107 = vmatpush2.msra.mxu0 0.0
    %108 = vmatprep.subr.mxu0 0.0
    %109 = vmatpush2.msra.mxu0 0.0
    %110 = vmatprep.subr.mxu0 0.0
    %111 = vmatpush2.msra.mxu0 0.0
    %112 = vmatprep.subr.mxu0 0.0
    %113 = vmatpush2.msra.mxu0 0.0
    %114 = vmatprep.subr.mxu0 0.0
    %115 = vmatpush2.msra.mxu0 0.0
    %116 = vmatprep.subr.mxu0 0.0
    %117 = vmatpush2.msra.mxu0 0.0
    %118 = vmatprep.subr.mxu0 0.0
    %119 = vmatpush2.msra.mxu0 0.0
    %120 = vmatprep.subr.mxu0 0.0
    %121 = vmatpush2.msra.mxu0 0.0
    %122 = vmatprep.subr.mxu0 0.0
    %123 = vmatpush2.msra.mxu0 0.0
    %124 = vmatprep.subr.mxu0 0.0
    %125 = vmatpush2.msra.mxu0 0.0
    %126 = vmatprep.subr.mxu0 0.0
    %127 = vmatpush2.msra.mxu0 0.0
    %128 = vmatprep.subr.mxu0 0.0
    %129 = vmatpush2.msra.mxu0 0.0
    %130 = vmatprep.subr.mxu0 0.0
    %131 = vmatpush2.msra.mxu0 0.0
    %132 = vmatprep.subr.mxu0 0.0
    %133 = vmatpush2.msra.mxu0 0.0
    %134 = vmatprep.mubr.f32.mxu0 0.0
    %135 = vmatmul.mubr.f32.gmra.mxu0 %v59
    %v136 = vpop.f32.mrf.mxu0
    %v137 = vadd.f32 %v40, %v136
    %v138 = vpop.f32.mrf.mxu0
    %139 = vmatprep.mubr.f32.mxu0 0.0
    %140 = vmatmul.mubr.f32.gmra.mxu0 %v62
    %v141 = vpop.f32.mrf.mxu0
    %v142 = vadd.f32 %v45, %v141
    %v143 = vpop.f32.mrf.mxu0
    %144 = vmatprep.mubr.f32.mxu0 0.0
    %145 = vmatmul.mubr.f32.gmra.mxu0 %v65
    %v146 = vpop.f32.mrf.mxu0
    %v147 = vadd.f32 %v50, %v146
    %v148 = vpop.f32.mrf.mxu0
    %149 = vmatprep.mubr.f32.mxu0 0.0
    %150 = vmatmul.mubr.f32.gmra.mxu0 %v68
    %v151 = vpop.f32.mrf.mxu0
    %v152 = vadd.f32 %v55, %v151
    %v153 = vpop.f32.mrf.mxu0
    %154 = vdwg.mxu0
    %v155 = vmax.f32 %v137, 0.0
    %v156 = vmax.f32 %v142, 0.0
    %v157 = vmax.f32 %v147, 0.0
    %v158 = vmax.f32 %v152, 0.0
    %v159 = vld [vmem:[%s3] sm:$0xff]
    %v160 = vld [vmem:[%s3 + $0x8] sm:$0xff]
    %v161 = vld [vmem:[%s3 + $0x10] sm:$0xff]
    %v162 = vld [vmem:[%s3 + $0x18] sm:$0xff]
    %v163 = vld [vmem:[%s4] sm:$0xff]
    %v164 = vld [vmem:[%s4 + $0x8] sm:$0xff]
    %v165 = vld [vmem:[%s4 + $0x10] sm:$0xff]
    %v166 = vld [vmem:[%s4 + $0x18] sm:$0xff]
    %168 = vset.pattern.permute.xlu0 0
    %169 = vperm.xlu0 %168, %v163
    %v170 = vpop.permute.xlu0 %169
    %173 = vset.pattern.permute.xlu0 0
    %174 = vperm.xlu0 %173, %v164
    %v175 = vpop.permute.xlu0 %174
    %178 = vset.pattern.permute.xlu0 0
    %179 = vperm.xlu0 %178, %v165
    %v180 = vpop.permute.xlu0 %179
    %183 = vset.pattern.permute.xlu0 0
    %184 = vperm.xlu0 %183, %v166
    %v185 = vpop.permute.xlu0 %184
    %vm187 = vcmask 261120
    %v189 = vsel %vm187, %v159, 0
    %v192 = vsel %vm187, %v160, 0
    %v195 = vsel %vm187, %v161, 0
    %v198 = vsel %vm187, %v162, 0
    %200 = vmatprep.subr.mxu0 0.0
    %201 = vmatpush1.msra.mxu0 0.0
    %202 = vmatprep.subr.mxu0 0.0
    %203 = vmatpush1.msra.mxu0 0.0
    %204 = vmatprep.subr.mxu0 0.0
    %205 = vmatpush1.msra.mxu0 0.0
    %206 = vmatprep.subr.mxu0 0.0
    %207 = vmatpush1.msra.mxu0 0.0
    %208 = vmatprep.subr.mxu0 0.0
    %209 = vmatpush1.msra.mxu0 0.0
    %210 = vmatprep.subr.mxu0 0.0
    %211 = vmatpush1.msra.mxu0 0.0
    %212 = vmatprep.subr.mxu0 0.0
    %213 = vmatpush1.msra.mxu0 0.0
    %214 = vmatprep.subr.mxu0 0.0
    %215 = vmatpush1.msra.mxu0 0.0
    %216 = vmatprep.subr.mxu0 0.0
    %217 = vmatpush1.msra.mxu0 0.0
    %218 = vmatprep.subr.mxu0 0.0
    %219 = vmatpush1.msra.mxu0 0.0
    %220 = vmatprep.subr.mxu0 0.0
    %221 = vmatpush1.msra.mxu0 0.0
    %222 = vmatprep.subr.mxu0 0.0
    %223 = vmatpush1.msra.mxu0 0.0
    %224 = vmatprep.subr.mxu0 0.0
    %225 = vmatpush1.msra.mxu0 %v158
    %226 = vmatprep.subr.mxu0 0.0
    %227 = vmatpush1.msra.mxu0 %v157
    %228 = vmatprep.subr.mxu0 0.0
    %229 = vmatpush1.msra.mxu0 %v156
    %230 = vmatprep.subr.mxu0 0.0
    %231 = vmatpush1.msra.mxu0 %v155
    %232 = vmatprep.subr.mxu0 0.0
    %233 = vmatpush2.msra.mxu0 0.0
    %234 = vmatprep.subr.mxu0 0.0
    %235 = vmatpush2.msra.mxu0 0.0
    %236 = vmatprep.subr.mxu0 0.0
    %237 = vmatpush2.msra.mxu0 0.0
    %238 = vmatprep.subr.mxu0 0.0
    %239 = vmatpush2.msra.mxu0 0.0
    %240 = vmatprep.subr.mxu0 0.0
    %241 = vmatpush2.msra.mxu0 0.0
    %242 = vmatprep.subr.mxu0 0.0
    %243 = vmatpush2.msra.mxu0 0.0
    %244 = vmatprep.subr.mxu0 0.0
    %245 = vmatpush2.msra.mxu0 0.0
    %246 = vmatprep.subr.mxu0 0.0
    %247 = vmatpush2.msra.mxu0 0.0
    %248 = vmatprep.subr.mxu0 0.0
    %249 = vmatpush2.msra.mxu0 0.0
    %250 = vmatprep.subr.mxu0 0.0
    %251 = vmatpush2.msra.mxu0 0.0
    %252 = vmatprep.subr.mxu0 0.0
    %253 = vmatpush2.msra.mxu0 0.0
    %254 = vmatprep.subr.mxu0 0.0
    %255 = vmatpush2.msra.mxu0 0.0
    %256 = vmatprep.subr.mxu0 0.0
    %257 = vmatpush2.msra.mxu0 0.0
    %258 = vmatprep.subr.mxu0 0.0
    %259 = vmatpush2.msra.mxu0 0.0
    %260 = vmatprep.subr.mxu0 0.0
    %261 = vmatpush2.msra.mxu0 0.0
    %262 = vmatprep.subr.mxu0 0.0
    %263 = vmatpush2.msra.mxu0 0.0
    %264 = vmatprep.mubr.f32.mxu0 0.0
    %265 = vmatmul.mubr.f32.gmra.mxu0 %v189
    %v266 = vpop.f32.mrf.mxu0
    %v267 = vadd.f32 %v170, %v266
    %v268 = vpop.f32.mrf.mxu0
    %269 = vmatprep.mubr.f32.mxu0 0.0
    %270 = vmatmul.mubr.f32.gmra.mxu0 %v192
    %v271 = vpop.f32.mrf.mxu0
    %v272 = vadd.f32 %v175, %v271
    %v273 = vpop.f32.mrf.mxu0
    %274 = vmatprep.mubr.f32.mxu0 0.0
    %275 = vmatmul.mubr.f32.gmra.mxu0 %v195
    %v276 = vpop.f32.mrf.mxu0
    %v277 = vadd.f32 %v180, %v276
    %v278 = vpop.f32.mrf.mxu0
    %279 = vmatprep.mubr.f32.mxu0 0.0
    %280 = vmatmul.mubr.f32.gmra.mxu0 %v198
    %v281 = vpop.f32.mrf.mxu0
    %v282 = vadd.f32 %v185, %v281
    %v283 = vpop.f32.mrf.mxu0
    %284 = vdwg.mxu0
    %v285 = vmax.f32 %v267, 0.0
    %v286 = vmax.f32 %v272, 0.0
    %v287 = vmax.f32 %v277, 0.0
    %v288 = vmax.f32 %v282, 0.0
    %v289 = vld [vmem:[%s5] sm:$0x1]
    %s290 = sld [smem:[#allocation2]]
    %v291 = vstv %s290
    %v293 = vsel %vm187, %v289, 0
    %295 = vmatprep.subr.mxu0 0.0
    %296 = vmatpush1.msra.mxu0 0.0
    %297 = vmatprep.subr.mxu0 0.0
    %298 = vmatpush1.msra.mxu0 0.0
    %299 = vmatprep.subr.mxu0 0.0
    %300 = vmatpush1.msra.mxu0 0.0
    %301 = vmatprep.subr.mxu0 0.0
    %302 = vmatpush1.msra.mxu0 0.0
    %303 = vmatprep.subr.mxu0 0.0
    %304 = vmatpush1.msra.mxu0 0.0
    %305 = vmatprep.subr.mxu0 0.0
    %306 = vmatpush1.msra.mxu0 0.0
    %307 = vmatprep.subr.mxu0 0.0
    %308 = vmatpush1.msra.mxu0 0.0
    %309 = vmatprep.subr.mxu0 0.0
    %310 = vmatpush1.msra.mxu0 0.0
    %311 = vmatprep.subr.mxu0 0.0
    %312 = vmatpush1.msra.mxu0 0.0
    %313 = vmatprep.subr.mxu0 0.0
    %314 = vmatpush1.msra.mxu0 0.0
    %315 = vmatprep.subr.mxu0 0.0
    %316 = vmatpush1.msra.mxu0 0.0
    %317 = vmatprep.subr.mxu0 0.0
    %318 = vmatpush1.msra.mxu0 0.0
    %319 = vmatprep.subr.mxu0 0.0
    %320 = vmatpush1.msra.mxu0 %v288
    %321 = vmatprep.subr.mxu0 0.0
    %322 = vmatpush1.msra.mxu0 %v287
    %323 = vmatprep.subr.mxu0 0.0
    %324 = vmatpush1.msra.mxu0 %v286
    %325 = vmatprep.subr.mxu0 0.0
    %326 = vmatpush1.msra.mxu0 %v285
    %327 = vmatprep.subr.mxu0 0.0
    %328 = vmatpush2.msra.mxu0 0.0
    %329 = vmatprep.subr.mxu0 0.0
    %330 = vmatpush2.msra.mxu0 0.0
    %331 = vmatprep.subr.mxu0 0.0
    %332 = vmatpush2.msra.mxu0 0.0
    %333 = vmatprep.subr.mxu0 0.0
    %334 = vmatpush2.msra.mxu0 0.0
    %335 = vmatprep.subr.mxu0 0.0
    %336 = vmatpush2.msra.mxu0 0.0
    %337 = vmatprep.subr.mxu0 0.0
    %338 = vmatpush2.msra.mxu0 0.0
    %339 = vmatprep.subr.mxu0 0.0
    %340 = vmatpush2.msra.mxu0 0.0
    %341 = vmatprep.subr.mxu0 0.0
    %342 = vmatpush2.msra.mxu0 0.0
    %343 = vmatprep.subr.mxu0 0.0
    %344 = vmatpush2.msra.mxu0 0.0
    %345 = vmatprep.subr.mxu0 0.0
    %346 = vmatpush2.msra.mxu0 0.0
    %347 = vmatprep.subr.mxu0 0.0
    %348 = vmatpush2.msra.mxu0 0.0
    %349 = vmatprep.subr.mxu0 0.0
    %350 = vmatpush2.msra.mxu0 0.0
    %351 = vmatprep.subr.mxu0 0.0
    %352 = vmatpush2.msra.mxu0 0.0
    %353 = vmatprep.subr.mxu0 0.0
    %354 = vmatpush2.msra.mxu0 0.0
    %355 = vmatprep.subr.mxu0 0.0
    %356 = vmatpush2.msra.mxu0 0.0
    %357 = vmatprep.subr.mxu0 0.0
    %358 = vmatpush2.msra.mxu0 0.0
    %359 = vmatprep.mubr.f32.mxu0 0.0
    %360 = vmatmul.mubr.f32.gmra.mxu0 %v293
    %v361 = vpop.f32.mrf.mxu0
    %v362 = vadd.f32 %v291, %v361
    %v363 = vpop.f32.mrf.mxu0
    %364 = vdwg.mxu0
    %vm365 = vcmask 57344
    %366 = vst.msk [vmem:[#allocation3] sm:$0x1] %vm365, %v362
    // Predicated region
    $region30: #{tpu_custom_call.1} parent=1 // pred_check
      _
    $region31: #{tpu_custom_call.1} parent=1 // pred_check_branch
      %368 = sbr.rel (0) target = $region33
    $region32: #{tpu_custom_call.1} parent=1 // pred_region
      %s370 = ssub.s32 16, 16
      %371 = vsyncadd [#allocation4], %s370
      %s373 = sshll.u32 [#allocation3], 4
      %s374 = int_to_ptr.vmem [resolvable:$true] %s373
      %376 = dma.vmem_to_hbm [thread:$0]  %s374, 16, %s7, [#allocation4]
    $region33: #{tpu_custom_call.1} parent=1 // pred_fallthru
      _
    // Predicated region
    $region34: #{tpu_custom_call.1} parent=1 // pred_check
      _
    $region35: #{tpu_custom_call.1} parent=1 // pred_check_branch
      %378 = sbr.rel (0) target = $region37
    $region36: #{tpu_custom_call.1} parent=1 // pred_region
      %379 = dma.done [#allocation4], 16
    $region37: #{tpu_custom_call.1} parent=1 // pred_fallthru
      _
    %380 = vsyncpa [#allocation4], 1

</llo_original>
